<compile_context>
chip_gen: v7x
topology: tpu7x:2x2x1
jax: 0.10.0
libtpu: 0.0.40
codegen_flags: <defaults>
</compile_context>

<pallas_src>
import jax
import jax.numpy as jnp
from jax.experimental import pallas as pl
from jax.experimental.pallas import tpu as pltpu

EPS = 1e-12  # F.normalize default eps


def _round_up(v, m):
    return (v + m - 1) // m * m


def _pick_tiles():
    """Per-generation tile sizes (tm, tn, tk)."""
    try:
        kind = jax.devices()[0].device_kind.lower()
    except Exception:  # pragma: no cover - defensive
        kind = ""
    if "v5" in kind:          # v5e: 128x128 MXUs, smaller HBM BW
        return 128, 128, 512
    return 256, 256, 512      # v6e / v7x: 256x256 MXU; fits easily in VMEM


def normed_linear_kernel(x_ref, w_ref, o_ref, acc_ref, xsq_ref, wsq_ref):
    k = pl.program_id(2)

    @pl.when(k == 0)
    def _():
        acc_ref[...] = jnp.zeros_like(acc_ref)
        xsq_ref[...] = jnp.zeros_like(xsq_ref)
        wsq_ref[...] = jnp.zeros_like(wsq_ref)

    # Load each tile once; reuse for norm accumulation and the MXU matmul.
    xv = x_ref[...]
    wv = w_ref[...]

    # f32 sum-of-squares accumulation (kept off the MXU path).
    xf = xv.astype(jnp.float32)
    wf = wv.astype(jnp.float32)
    xsq_ref[...] += jnp.sum(xf * xf, axis=1, keepdims=True)   # (tm, 1) lane-reduce
    wsq_ref[...] += jnp.sum(wf * wf, axis=0, keepdims=True)   # (1, tn) sublane-reduce

    # bf16 MXU matmul with f32 accumulation.
    acc_ref[...] += jnp.dot(
        xv.astype(jnp.bfloat16),
        wv.astype(jnp.bfloat16),
        preferred_element_type=jnp.float32,
    )

    @pl.when(k == pl.num_programs(2) - 1)
    def _():
        # 1 / max(||.||, eps) == rsqrt(max(sum_sq, eps^2))  -> EUP rsqrt.
        inv_row = jax.lax.rsqrt(jnp.maximum(xsq_ref[...], EPS * EPS))
        inv_col = jax.lax.rsqrt(jnp.maximum(wsq_ref[...], EPS * EPS))
        o_ref[...] = (acc_ref[...] * inv_row * inv_col).astype(o_ref.dtype)


def normed_linear(x, weight, out_dtype=None):
    n, kf = x.shape
    kf_w, m = weight.shape
    assert kf == kf_w, "in_features mismatch"
    if out_dtype is None:
        out_dtype = x.dtype

    tm, tn, tk = _pick_tiles()
    # Shrink tiles for small problems, staying (8,128)-aligned / lane-dense.
    tm = min(tm, _round_up(n, 128))
    tn = min(tn, _round_up(m, 128))
    tk = min(tk, _round_up(kf, 128))

    n_p, k_p, m_p = _round_up(n, tm), _round_up(kf, tk), _round_up(m, tn)
    if (n_p, k_p) != (n, kf):
        x = jnp.pad(x, ((0, n_p - n), (0, k_p - kf)))
    if (k_p, m_p) != (kf, m):
        weight = jnp.pad(weight, ((0, k_p - kf), (0, m_p - m)))

    grid = (n_p // tm, m_p // tn, k_p // tk)

    out = pl.pallas_call(
        normed_linear_kernel,
        out_shape=jax.ShapeDtypeStruct((n_p, m_p), out_dtype),
        grid_spec=pltpu.PrefetchScalarGridSpec(
            num_scalar_prefetch=0,
            grid=grid,
            in_specs=[
                pl.BlockSpec((tm, tk), lambda i, j, k: (i, k)),
                pl.BlockSpec((tk, tn), lambda i, j, k: (k, j)),
            ],
            out_specs=pl.BlockSpec((tm, tn), lambda i, j, k: (i, j)),
            scratch_shapes=[
                pltpu.VMEM((tm, tn), jnp.float32),  # matmul accumulator
                pltpu.VMEM((tm, 1), jnp.float32),   # row sum-of-squares of x
                pltpu.VMEM((1, tn), jnp.float32),   # col sum-of-squares of w
            ],
        ),
        compiler_params=pltpu.CompilerParams(
            dimension_semantics=("parallel", "parallel", "arbitrary"),
        ),
    )(x, weight)

    return out[:n, :m]


def init_normed_linear_weight(key, in_features, out_features):
    """Replicates: uniform_(-1, 1).renorm_(2, 1, 1e-5).mul_(1e5)."""
    w = jax.random.uniform(
        key, (in_features, out_features), dtype=jnp.float32, minval=-1.0, maxval=1.0
    )
    col_norm = jnp.sqrt(jnp.sum(w * w, axis=0, keepdims=True))
    maxnorm = 1e-5
    scale = jnp.where(col_norm > maxnorm, maxnorm / (col_norm + 1e-7), 1.0)
    return w * scale * 1e5


def normed_linear_ref(x, weight):
    x_n = x / jnp.maximum(jnp.sqrt(jnp.sum(x * x, axis=1, keepdims=True)), EPS)
    w_n = weight / jnp.maximum(
        jnp.sqrt(jnp.sum(weight * weight, axis=0, keepdims=True)), EPS
    )
    return x_n @ w_n


if __name__ == "__main__":
    key = jax.random.PRNGKey(0)
    k_x, k_w, k_x2, k_w2 = jax.random.split(key, 4)

    # Small demo shapes consistent with the module's 2-D mm.
    batch, in_features, out_features = 8, 32, 16
    x = jax.random.normal(k_x, (batch, in_features), dtype=jnp.float32)
    weight = init_normed_linear_weight(k_w, in_features, out_features)

    out = jax.block_until_ready(normed_linear(x, weight))
    ref = normed_linear_ref(x, weight)
    assert out.shape == (batch, out_features)
    # bf16 MXU operands (f32 accumulation) + bounded [-1,1] cosine outputs
    # -> loosened tolerance vs f32 reference.
    assert jnp.allclose(out, ref, atol=2e-2, rtol=2e-2), (
        f"small-case mismatch, max abs err {float(jnp.max(jnp.abs(out - ref))):.3e}"
    )

    # Non-tile-aligned case exercising the full 3-D grid (multi K-tile) and
    # the padding/slicing path.
    batch2, in2, out2 = 260, 1024, 200
    x2 = jax.random.normal(k_x2, (batch2, in2), dtype=jnp.float32)
    w2 = init_normed_linear_weight(k_w2, in2, out2)
    out_big = jax.block_until_ready(normed_linear(x2, w2))
    ref_big = normed_linear_ref(x2, w2)
    assert out_big.shape == (batch2, out2)
    assert jnp.allclose(out_big, ref_big, atol=2e-2, rtol=2e-2), (
        f"large-case mismatch, max abs err {float(jnp.max(jnp.abs(out_big - ref_big))):.3e}"
    )

    print("KERNEL_OK")
</pallas_src>

<mosaic_0001>
module attributes {stable_mosaic.version = 11 : i64} {
  func.func @normed_linear_kernel(%arg0: i32, %arg1: i32, %arg2: i32, %arg3: memref<128x128xf32, #tpu.memory_space<vmem>>, %arg4: memref<128x128xf32, #tpu.memory_space<vmem>>, %arg5: memref<128x128xf32, #tpu.memory_space<vmem>>, %arg6: memref<128x128xf32, #tpu.memory_space<vmem>>, %arg7: memref<128x1xf32, #tpu.memory_space<vmem>>, %arg8: memref<1x128xf32, #tpu.memory_space<vmem>>) attributes {dimension_semantics = [#tpu.dimension_semantics<parallel>, #tpu.dimension_semantics<parallel>, #tpu.dimension_semantics<arbitrary>], iteration_bounds = array<i64: 1, 1, 1>, scalar_prefetch = 0 : i64, scratch_operands = 3 : i64, tpu.core_type = #tpu.core_type<tc>, window_params = [{transform_indices = @transform_0, window_bounds = array<i64: 128, 128>}, {transform_indices = @transform_1, window_bounds = array<i64: 128, 128>}, {transform_indices = @transform_2, window_bounds = array<i64: 128, 128>}]} {
    %c0_i32 = arith.constant 0 : i32
    %0 = arith.cmpi eq, %arg2, %c0_i32 : i32
    %1 = arith.extui %0 : i1 to i32
    %c0_i32_0 = arith.constant 0 : i32
    %2 = arith.cmpi ne, %1, %c0_i32_0 : i32
    scf.if %2 {
      %cst_20 = arith.constant 0.000000e+00 : f32
      %26 = vector.broadcast %cst_20 : f32 to vector<128x128xf32>
      %c0_21 = arith.constant 0 : index
      %c0_22 = arith.constant 0 : index
      %27 = vector.load %arg6[%c0_21, %c0_22] : memref<128x128xf32, #tpu.memory_space<vmem>>, vector<128x128xf32>
      tpu.vector_store %arg6[%c0_21, %c0_22], %26 {strides = array<i32>} : memref<128x128xf32, #tpu.memory_space<vmem>>, vector<128x128xf32>,
      %cst_23 = arith.constant 0.000000e+00 : f32
      %28 = vector.broadcast %cst_23 : f32 to vector<128x1xf32>
      %c0_24 = arith.constant 0 : index
      %c0_25 = arith.constant 0 : index
      %29 = vector.load %arg7[%c0_24, %c0_25] : memref<128x1xf32, #tpu.memory_space<vmem>>, vector<128x1xf32>
      tpu.vector_store %arg7[%c0_24, %c0_25], %28 {strides = array<i32>} : memref<128x1xf32, #tpu.memory_space<vmem>>, vector<128x1xf32>,
      %cst_26 = arith.constant 0.000000e+00 : f32
      %30 = vector.broadcast %cst_26 : f32 to vector<1x128xf32>
      %c0_27 = arith.constant 0 : index
      %c0_28 = arith.constant 0 : index
      %31 = vector.load %arg8[%c0_27, %c0_28] : memref<1x128xf32, #tpu.memory_space<vmem>>, vector<1x128xf32>
      tpu.vector_store %arg8[%c0_27, %c0_28], %30 {strides = array<i32>} : memref<1x128xf32, #tpu.memory_space<vmem>>, vector<1x128xf32>,
    } else {
    }
    %c0 = arith.constant 0 : index
    %c0_1 = arith.constant 0 : index
    %3 = vector.load %arg3[%c0, %c0_1] : memref<128x128xf32, #tpu.memory_space<vmem>>, vector<128x128xf32>
    %c0_2 = arith.constant 0 : index
    %c0_3 = arith.constant 0 : index
    %4 = vector.load %arg4[%c0_2, %c0_3] : memref<128x128xf32, #tpu.memory_space<vmem>>, vector<128x128xf32>
    %c0_4 = arith.constant 0 : index
    %c0_5 = arith.constant 0 : index
    %5 = vector.load %arg7[%c0_4, %c0_5] : memref<128x1xf32, #tpu.memory_space<vmem>>, vector<128x1xf32>
    %6 = arith.mulf %3, %3 : vector<128x128xf32>
    %cst = arith.constant dense<0.000000e+00> : vector<128xf32>
    %7 = vector.multi_reduction <add>, %6, %cst [1] : vector<128x128xf32> to vector<128xf32>
    %8 = vector.shape_cast %7 : vector<128xf32> to vector<128x1xf32>
    %9 = arith.addf %5, %8 : vector<128x1xf32>
    %c0_6 = arith.constant 0 : index
    %c0_7 = arith.constant 0 : index
    %10 = vector.load %arg7[%c0_6, %c0_7] : memref<128x1xf32, #tpu.memory_space<vmem>>, vector<128x1xf32>
    tpu.vector_store %arg7[%c0_6, %c0_7], %9 {strides = array<i32>} : memref<128x1xf32, #tpu.memory_space<vmem>>, vector<128x1xf32>,
    %c0_8 = arith.constant 0 : index
    %c0_9 = arith.constant 0 : index
    %11 = vector.load %arg8[%c0_8, %c0_9] : memref<1x128xf32, #tpu.memory_space<vmem>>, vector<1x128xf32>
    %12 = arith.mulf %4, %4 : vector<128x128xf32>
    %cst_10 = arith.constant dense<0.000000e+00> : vector<128xf32>
    %13 = vector.multi_reduction <add>, %12, %cst_10 [0] : vector<128x128xf32> to vector<128xf32>
    %14 = vector.shape_cast %13 : vector<128xf32> to vector<1x128xf32>
    %15 = arith.addf %11, %14 : vector<1x128xf32>
    %c0_11 = arith.constant 0 : index
    %c0_12 = arith.constant 0 : index
    %16 = vector.load %arg8[%c0_11, %c0_12] : memref<1x128xf32, #tpu.memory_space<vmem>>, vector<1x128xf32>
    tpu.vector_store %arg8[%c0_11, %c0_12], %15 {strides = array<i32>} : memref<1x128xf32, #tpu.memory_space<vmem>>, vector<1x128xf32>,
    %c0_13 = arith.constant 0 : index
    %c0_14 = arith.constant 0 : index
    %17 = vector.load %arg6[%c0_13, %c0_14] : memref<128x128xf32, #tpu.memory_space<vmem>>, vector<128x128xf32>
    %18 = arith.truncf %3 : vector<128x128xf32> to vector<128x128xbf16>
    %19 = arith.truncf %4 : vector<128x128xf32> to vector<128x128xbf16>
    %cst_15 = arith.constant dense<0.000000e+00> : vector<128x128xf32>
    %20 = tpu.matmul %18, %19, %cst_15 {dimension_numbers = #tpu.dot_dimension_numbers<[1], [0], [0], [1], [0, 0, 1, 1], [], []>} : vector<128x128xbf16>, vector<128x128xbf16>, vector<128x128xf32> -> vector<128x128xf32>
    %21 = arith.addf %17, %20 : vector<128x128xf32>
    %c0_16 = arith.constant 0 : index
    %c0_17 = arith.constant 0 : index
    %22 = vector.load %arg6[%c0_16, %c0_17] : memref<128x128xf32, #tpu.memory_space<vmem>>, vector<128x128xf32>
    tpu.vector_store %arg6[%c0_16, %c0_17], %21 {strides = array<i32>} : memref<128x128xf32, #tpu.memory_space<vmem>>, vector<128x128xf32>,
    %c0_i32_18 = arith.constant 0 : i32
    %23 = arith.cmpi eq, %arg2, %c0_i32_18 : i32
    %24 = arith.extui %23 : i1 to i32
    %c0_i32_19 = arith.constant 0 : i32
    %25 = arith.cmpi ne, %24, %c0_i32_19 : i32
    scf.if %25 {
      %c0_20 = arith.constant 0 : index
      %c0_21 = arith.constant 0 : index
      %26 = vector.load %arg7[%c0_20, %c0_21] : memref<128x1xf32, #tpu.memory_space<vmem>>, vector<128x1xf32>
      %cst_22 = arith.constant 1.000000e-24 : f32
      %27 = vector.broadcast %cst_22 : f32 to vector<128x1xf32>
      %28 = arith.maximumf %26, %27 : vector<128x1xf32>
      %29 = math.rsqrt %28 : vector<128x1xf32>
      %c0_23 = arith.constant 0 : index
      %c0_24 = arith.constant 0 : index
      %30 = vector.load %arg8[%c0_23, %c0_24] : memref<1x128xf32, #tpu.memory_space<vmem>>, vector<1x128xf32>
      %cst_25 = arith.constant 1.000000e-24 : f32
      %31 = vector.broadcast %cst_25 : f32 to vector<1x128xf32>
      %32 = arith.maximumf %30, %31 : vector<1x128xf32>
      %33 = math.rsqrt %32 : vector<1x128xf32>
      %c0_26 = arith.constant 0 : index
      %c0_27 = arith.constant 0 : index
      %34 = vector.load %arg6[%c0_26, %c0_27] : memref<128x128xf32, #tpu.memory_space<vmem>>, vector<128x128xf32>
      %35 = vector.broadcast %29 : vector<128x1xf32> to vector<128x128xf32>
      %36 = arith.mulf %34, %35 : vector<128x128xf32>
      %37 = vector.broadcast %33 : vector<1x128xf32> to vector<128x128xf32>
      %38 = arith.mulf %36, %37 : vector<128x128xf32>
      %c0_28 = arith.constant 0 : index
      %c0_29 = arith.constant 0 : index
      %39 = vector.load %arg5[%c0_28, %c0_29] : memref<128x128xf32, #tpu.memory_space<vmem>>, vector<128x128xf32>
      tpu.vector_store %arg5[%c0_28, %c0_29], %38 {strides = array<i32>} : memref<128x128xf32, #tpu.memory_space<vmem>>, vector<128x128xf32>,
    } else {
    }
    return
  }
  func.func @transform_0(%arg0: i32, %arg1: i32, %arg2: i32) -> (i32, i32) {
    %c0_i32 = arith.constant 0 : i32
    return %arg0, %arg2 : i32, i32
  }
  func.func @transform_1(%arg0: i32, %arg1: i32, %arg2: i32) -> (i32, i32) {
    %c0_i32 = arith.constant 0 : i32
    return %arg2, %arg1 : i32, i32
  }
  func.func @transform_2(%arg0: i32, %arg1: i32, %arg2: i32) -> (i32, i32) {
    %c0_i32 = arith.constant 0 : i32
    return %arg0, %arg1 : i32, i32
  }
}

</mosaic_0001>

<llo_original>
// kernel: tpu_custom_call.1
$region0: #{tpu_custom_call.1}
  #allocation0 [shape = 'u32[]', space=smem, size = 0x4, offset = 0x4, fixed_abs, tag = 'smem constant byte address 0x4 - core index']
  #allocation1 [shape = 'u32[144,128]{1,0:T(1,128)}', space=vmem, size = 0x12000, scoped, tag = 'internal scratch']
  #allocation2 [shape = 'f32[128,128]{1,0:T(8,128)}', space=vmem, size = 0x10000, scoped, tag = 'scratch operand']
  #allocation3 [shape = 'f32[128,1]{1,0:T(8,128)}', space=vmem, size = 0x10000, scoped, tag = 'scratch operand']
  #allocation4 [shape = 'f32[1,128]{1,0:T(1,128)}', space=vmem, size = 0x200, scoped, tag = 'scratch operand']
  %s0 = inlined_call_operand.hbm [shape: f32[128,128], index: 0, kind: input, shape index: {}]
  %s1 = inlined_call_operand.hbm [shape: f32[128,128], index: 1, kind: input, shape index: {}]
  %s2 = inlined_call_operand.hbm [shape: f32[128,128], index: 2, kind: output, shape index: {}]
  %s3 = sld [smem:[#allocation0]]
  $region34: #{tpu_custom_call.1} parent=0
    _
  %s5 = ssub.s32 1, %s3
  %s6 = scalar_select 0, %s5, %s3
  $region1: #{tpu_custom_call.1} parent=0
    #allocation5 [shape = 'u8[65536]{0}', space=vmem, size = 0x10000, scoped, tag = 'input window, operand 0, single buffered']
    #allocation6 [shape = 's32[1]{0}', space=sflag, size = 0x4, scoped, tag = 'scoped memory for tpu_custom_call.1']
    #allocation7 [shape = 's32[1]{0}', space=sflag, size = 0x4, scoped, tag = 'scoped memory for tpu_custom_call.1']
    #allocation8 [shape = 'u8[65536]{0}', space=vmem, size = 0x10000, scoped, tag = 'input window, operand 1, single buffered']
    #allocation9 [shape = 's32[1]{0}', space=sflag, size = 0x4, scoped, tag = 'scoped memory for tpu_custom_call.1']
    #allocation10 [shape = 'u8[65536]{0}', space=vmem, size = 0x10000, scoped, tag = 'output window, operand 0, single buffered']
    %7 = vsyncpa [#allocation6], 0
    %8 = vsyncpa [#allocation9], 0
    %9 = vsyncpa [#allocation7], 0
    // Predicated region
    $region2: #{tpu_custom_call.1} parent=1 // pred_check
      _
    $region3: #{tpu_custom_call.1} parent=1 // pred_check_branch
      %11 = sbr.rel (0) target = $region5
    $region4: #{tpu_custom_call.1} parent=1 // pred_region
      %s13 = ssub.s32 2048, 2048
      %14 = vsyncadd [#allocation6], %s13
      %s15 = sshll.u32 [#allocation5], 4
      %s16 = int_to_ptr.vmem [resolvable:$true] %s15
      %21 = dma.hbm_to_vmem [thread:$0]  %s0, 2048, %s16, [#allocation6], 128, 128, 8
    $region5: #{tpu_custom_call.1} parent=1 // pred_fallthru
      _
    // Predicated region
    $region6: #{tpu_custom_call.1} parent=1 // pred_check
      _
    $region7: #{tpu_custom_call.1} parent=1 // pred_check_branch
      %23 = sbr.rel (0) target = $region9
    $region8: #{tpu_custom_call.1} parent=1 // pred_region
      %s25 = ssub.s32 2048, 2048
      %26 = vsyncadd [#allocation9], %s25
      %s27 = sshll.u32 [#allocation8], 4
      %s28 = int_to_ptr.vmem [resolvable:$true] %s27
      %33 = dma.hbm_to_vmem [thread:$0]  %s1, 2048, %s28, [#allocation9], 128, 128, 8
    $region9: #{tpu_custom_call.1} parent=1 // pred_fallthru
      _
    // Predicated region
    $region10: #{tpu_custom_call.1} parent=1 // pred_check
      _
    $region11: #{tpu_custom_call.1} parent=1 // pred_check_branch
      %35 = sbr.rel (0) target = $region13
    $region12: #{tpu_custom_call.1} parent=1 // pred_region
      %36 = dma.done [#allocation6], 2048
    $region13: #{tpu_custom_call.1} parent=1 // pred_fallthru
      _
    // Predicated region
    $region14: #{tpu_custom_call.1} parent=1 // pred_check
      _
    $region15: #{tpu_custom_call.1} parent=1 // pred_check_branch
      %38 = sbr.rel (0) target = $region17
    $region16: #{tpu_custom_call.1} parent=1 // pred_region
      %39 = dma.done [#allocation9], 2048
    $region17: #{tpu_custom_call.1} parent=1 // pred_fallthru
      _
    %p41 = scmp.eq.s32.totalorder 0, 0
    // Predicated region
    $region18: #{tpu_custom_call.1} parent=1 // pred_check
      %p42 = pneg %p41
    $region19: #{tpu_custom_call.1} parent=1 // pred_check_branch
      %44 = sbr.rel (%p42) target = $region21
    $region20: #{tpu_custom_call.1} parent=1 // pred_region
      %45 = vst [vmem:[#allocation2] sm:$0xff] 0.0
      %46 = vst [vmem:[#allocation2 + $0x8] sm:$0xff] 0.0
      %47 = vst [vmem:[#allocation2 + $0x10] sm:$0xff] 0.0
      %48 = vst [vmem:[#allocation2 + $0x18] sm:$0xff] 0.0
      %49 = vst [vmem:[#allocation2 + $0x20] sm:$0xff] 0.0
      %50 = vst [vmem:[#allocation2 + $0x28] sm:$0xff] 0.0
      %51 = vst [vmem:[#allocation2 + $0x30] sm:$0xff] 0.0
      %52 = vst [vmem:[#allocation2 + $0x38] sm:$0xff] 0.0
      %53 = vst [vmem:[#allocation2 + $0x40] sm:$0xff] 0.0
      %54 = vst [vmem:[#allocation2 + $0x48] sm:$0xff] 0.0
      %55 = vst [vmem:[#allocation2 + $0x50] sm:$0xff] 0.0
      %56 = vst [vmem:[#allocation2 + $0x58] sm:$0xff] 0.0
      %57 = vst [vmem:[#allocation2 + $0x60] sm:$0xff] 0.0
      %58 = vst [vmem:[#allocation2 + $0x68] sm:$0xff] 0.0
      %59 = vst [vmem:[#allocation2 + $0x70] sm:$0xff] 0.0
      %60 = vst [vmem:[#allocation2 + $0x78] sm:$0xff] 0.0
      %vm61 = vcmask 7168
      %62 = vst.msk [vmem:[#allocation3] sm:$0xff] %vm61, 0.0
      %63 = vst.msk [vmem:[#allocation3 + $0x8] sm:$0xff] %vm61, 0.0
      %64 = vst.msk [vmem:[#allocation3 + $0x10] sm:$0xff] %vm61, 0.0
      %65 = vst.msk [vmem:[#allocation3 + $0x18] sm:$0xff] %vm61, 0.0
      %66 = vst.msk [vmem:[#allocation3 + $0x20] sm:$0xff] %vm61, 0.0
      %67 = vst.msk [vmem:[#allocation3 + $0x28] sm:$0xff] %vm61, 0.0
      %68 = vst.msk [vmem:[#allocation3 + $0x30] sm:$0xff] %vm61, 0.0
      %69 = vst.msk [vmem:[#allocation3 + $0x38] sm:$0xff] %vm61, 0.0
      %70 = vst.msk [vmem:[#allocation3 + $0x40] sm:$0xff] %vm61, 0.0
      %71 = vst.msk [vmem:[#allocation3 + $0x48] sm:$0xff] %vm61, 0.0
      %72 = vst.msk [vmem:[#allocation3 + $0x50] sm:$0xff] %vm61, 0.0
      %73 = vst.msk [vmem:[#allocation3 + $0x58] sm:$0xff] %vm61, 0.0
      %74 = vst.msk [vmem:[#allocation3 + $0x60] sm:$0xff] %vm61, 0.0
      %75 = vst.msk [vmem:[#allocation3 + $0x68] sm:$0xff] %vm61, 0.0
      %76 = vst.msk [vmem:[#allocation3 + $0x70] sm:$0xff] %vm61, 0.0
      %77 = vst.msk [vmem:[#allocation3 + $0x78] sm:$0xff] %vm61, 0.0
      %78 = vst [vmem:[#allocation4] sm:$0x1] 0.0
    $region21: #{tpu_custom_call.1} parent=1 // pred_fallthru
      _
    %v79 = vld [vmem:[#allocation5] sm:$0xff]
    %v80 = vld [vmem:[#allocation5 + $0x8] sm:$0xff]
    %v81 = vld [vmem:[#allocation5 + $0x10] sm:$0xff]
    %v82 = vld [vmem:[#allocation5 + $0x18] sm:$0xff]
    %v83 = vld [vmem:[#allocation5 + $0x20] sm:$0xff]
    %v84 = vld [vmem:[#allocation5 + $0x28] sm:$0xff]
    %v85 = vld [vmem:[#allocation5 + $0x30] sm:$0xff]
    %v86 = vld [vmem:[#allocation5 + $0x38] sm:$0xff]
    %v87 = vld [vmem:[#allocation5 + $0x40] sm:$0xff]
    %v88 = vld [vmem:[#allocation5 + $0x48] sm:$0xff]
    %v89 = vld [vmem:[#allocation5 + $0x50] sm:$0xff]
    %v90 = vld [vmem:[#allocation5 + $0x58] sm:$0xff]
    %v91 = vld [vmem:[#allocation5 + $0x60] sm:$0xff]
    %v92 = vld [vmem:[#allocation5 + $0x68] sm:$0xff]
    %v93 = vld [vmem:[#allocation5 + $0x70] sm:$0xff]
    %v94 = vld [vmem:[#allocation5 + $0x78] sm:$0xff]
    %v95 = vld [vmem:[#allocation8] sm:$0xff]
    %v96 = vld [vmem:[#allocation8 + $0x8] sm:$0xff]
    %v97 = vld [vmem:[#allocation8 + $0x10] sm:$0xff]
    %v98 = vld [vmem:[#allocation8 + $0x18] sm:$0xff]
    %v99 = vld [vmem:[#allocation8 + $0x20] sm:$0xff]
    %v100 = vld [vmem:[#allocation8 + $0x28] sm:$0xff]
    %v101 = vld [vmem:[#allocation8 + $0x30] sm:$0xff]
    %v102 = vld [vmem:[#allocation8 + $0x38] sm:$0xff]
    %v103 = vld [vmem:[#allocation8 + $0x40] sm:$0xff]
    %v104 = vld [vmem:[#allocation8 + $0x48] sm:$0xff]
    %v105 = vld [vmem:[#allocation8 + $0x50] sm:$0xff]
    %v106 = vld [vmem:[#allocation8 + $0x58] sm:$0xff]
    %v107 = vld [vmem:[#allocation8 + $0x60] sm:$0xff]
    %v108 = vld [vmem:[#allocation8 + $0x68] sm:$0xff]
    %v109 = vld [vmem:[#allocation8 + $0x70] sm:$0xff]
    %v110 = vld [vmem:[#allocation8 + $0x78] sm:$0xff]
    %v111 = vld [vmem:[#allocation3] sm:$0xff]
    %v112 = vld [vmem:[#allocation3 + $0x8] sm:$0xff]
    %v113 = vld [vmem:[#allocation3 + $0x10] sm:$0xff]
    %v114 = vld [vmem:[#allocation3 + $0x18] sm:$0xff]
    %v115 = vld [vmem:[#allocation3 + $0x20] sm:$0xff]
    %v116 = vld [vmem:[#allocation3 + $0x28] sm:$0xff]
    %v117 = vld [vmem:[#allocation3 + $0x30] sm:$0xff]
    %v118 = vld [vmem:[#allocation3 + $0x38] sm:$0xff]
    %v119 = vld [vmem:[#allocation3 + $0x40] sm:$0xff]
    %v120 = vld [vmem:[#allocation3 + $0x48] sm:$0xff]
    %v121 = vld [vmem:[#allocation3 + $0x50] sm:$0xff]
    %v122 = vld [vmem:[#allocation3 + $0x58] sm:$0xff]
    %v123 = vld [vmem:[#allocation3 + $0x60] sm:$0xff]
    %v124 = vld [vmem:[#allocation3 + $0x68] sm:$0xff]
    %v125 = vld [vmem:[#allocation3 + $0x70] sm:$0xff]
    %v126 = vld [vmem:[#allocation3 + $0x78] sm:$0xff]
    %v127 = vmul.f32 %v79, %v79
    %v128 = vmul.f32 %v80, %v80
    %v129 = vmul.f32 %v81, %v81
    %v130 = vmul.f32 %v82, %v82
    %v131 = vmul.f32 %v83, %v83
    %v132 = vmul.f32 %v84, %v84
    %v133 = vmul.f32 %v85, %v85
    %v134 = vmul.f32 %v86, %v86
    %v135 = vmul.f32 %v87, %v87
    %v136 = vmul.f32 %v88, %v88
    %v137 = vmul.f32 %v89, %v89
    %v138 = vmul.f32 %v90, %v90
    %v139 = vmul.f32 %v91, %v91
    %v140 = vmul.f32 %v92, %v92
    %v141 = vmul.f32 %v93, %v93
    %v142 = vmul.f32 %v94, %v94
    %143 = vadd.xlane.f32.xlu0 %v127
    %v144 = vpop.xlane.xlu0 %143
    %145 = vadd.xlane.f32.xlu0 %v128
    %v146 = vpop.xlane.xlu0 %145
    %147 = vadd.xlane.f32.xlu0 %v129
    %v148 = vpop.xlane.xlu0 %147
    %149 = vadd.xlane.f32.xlu0 %v130
    %v150 = vpop.xlane.xlu0 %149
    %151 = vadd.xlane.f32.xlu0 %v131
    %v152 = vpop.xlane.xlu0 %151
    %153 = vadd.xlane.f32.xlu0 %v132
    %v154 = vpop.xlane.xlu0 %153
    %155 = vadd.xlane.f32.xlu0 %v133
    %v156 = vpop.xlane.xlu0 %155
    %157 = vadd.xlane.f32.xlu0 %v134
    %v158 = vpop.xlane.xlu0 %157
    %159 = vadd.xlane.f32.xlu0 %v135
    %v160 = vpop.xlane.xlu0 %159
    %161 = vadd.xlane.f32.xlu0 %v136
    %v162 = vpop.xlane.xlu0 %161
    %163 = vadd.xlane.f32.xlu0 %v137
    %v164 = vpop.xlane.xlu0 %163
    %165 = vadd.xlane.f32.xlu0 %v138
    %v166 = vpop.xlane.xlu0 %165
    %167 = vadd.xlane.f32.xlu0 %v139
    %v168 = vpop.xlane.xlu0 %167
    %169 = vadd.xlane.f32.xlu0 %v140
    %v170 = vpop.xlane.xlu0 %169
    %171 = vadd.xlane.f32.xlu0 %v141
    %v172 = vpop.xlane.xlu0 %171
    %173 = vadd.xlane.f32.xlu0 %v142
    %v174 = vpop.xlane.xlu0 %173
    %v175 = vadd.f32 %v111, %v144
    %v176 = vadd.f32 %v112, %v146
    %v177 = vadd.f32 %v113, %v148
    %v178 = vadd.f32 %v114, %v150
    %v179 = vadd.f32 %v115, %v152
    %v180 = vadd.f32 %v116, %v154
    %v181 = vadd.f32 %v117, %v156
    %v182 = vadd.f32 %v118, %v158
    %v183 = vadd.f32 %v119, %v160
    %v184 = vadd.f32 %v120, %v162
    %v185 = vadd.f32 %v121, %v164
    %v186 = vadd.f32 %v122, %v166
    %v187 = vadd.f32 %v123, %v168
    %v188 = vadd.f32 %v124, %v170
    %v189 = vadd.f32 %v125, %v172
    %v190 = vadd.f32 %v126, %v174
    %vm191 = vcmask 7168
    %192 = vst.msk [vmem:[#allocation3] sm:$0xff] %vm191, %v175
    %193 = vst.msk [vmem:[#allocation3 + $0x8] sm:$0xff] %vm191, %v176
    %194 = vst.msk [vmem:[#allocation3 + $0x10] sm:$0xff] %vm191, %v177
    %195 = vst.msk [vmem:[#allocation3 + $0x18] sm:$0xff] %vm191, %v178
    %196 = vst.msk [vmem:[#allocation3 + $0x20] sm:$0xff] %vm191, %v179
    %197 = vst.msk [vmem:[#allocation3 + $0x28] sm:$0xff] %vm191, %v180
    %198 = vst.msk [vmem:[#allocation3 + $0x30] sm:$0xff] %vm191, %v181
    %199 = vst.msk [vmem:[#allocation3 + $0x38] sm:$0xff] %vm191, %v182
    %200 = vst.msk [vmem:[#allocation3 + $0x40] sm:$0xff] %vm191, %v183
    %201 = vst.msk [vmem:[#allocation3 + $0x48] sm:$0xff] %vm191, %v184
    %202 = vst.msk [vmem:[#allocation3 + $0x50] sm:$0xff] %vm191, %v185
    %203 = vst.msk [vmem:[#allocation3 + $0x58] sm:$0xff] %vm191, %v186
    %204 = vst.msk [vmem:[#allocation3 + $0x60] sm:$0xff] %vm191, %v187
    %205 = vst.msk [vmem:[#allocation3 + $0x68] sm:$0xff] %vm191, %v188
    %206 = vst.msk [vmem:[#allocation3 + $0x70] sm:$0xff] %vm191, %v189
    %207 = vst.msk [vmem:[#allocation3 + $0x78] sm:$0xff] %vm191, %v190
    %v208 = vld [vmem:[#allocation4] sm:$0x1]
    %v209 = vmul.f32 %v95, %v95
    %v210 = vmul.f32 %v96, %v96
    %v211 = vmul.f32 %v97, %v97
    %v212 = vmul.f32 %v98, %v98
    %v213 = vmul.f32 %v99, %v99
    %v214 = vmul.f32 %v100, %v100
    %v215 = vmul.f32 %v101, %v101
    %v216 = vmul.f32 %v102, %v102
    %v217 = vmul.f32 %v103, %v103
    %v218 = vmul.f32 %v104, %v104
    %v219 = vmul.f32 %v105, %v105
    %v220 = vmul.f32 %v106, %v106
    %v221 = vmul.f32 %v107, %v107
    %v222 = vmul.f32 %v108, %v108
    %v223 = vmul.f32 %v109, %v109
    %v224 = vmul.f32 %v110, %v110
    %v225 = vadd.f32 %v209, %v210
    %v226 = vadd.f32 %v225, %v211
    %v227 = vadd.f32 %v226, %v212
    %v228 = vadd.f32 %v227, %v213
    %v229 = vadd.f32 %v228, %v214
    %v230 = vadd.f32 %v229, %v215
    %v231 = vadd.f32 %v230, %v216
    %v232 = vadd.f32 %v231, %v217
    %v233 = vadd.f32 %v232, %v218
    %v234 = vadd.f32 %v233, %v219
    %v235 = vadd.f32 %v234, %v220
    %v236 = vadd.f32 %v235, %v221
    %v237 = vadd.f32 %v236, %v222
    %v238 = vadd.f32 %v237, %v223
    %v239 = vadd.f32 %v238, %v224
    %v240 = vrot.slane %v239, 4
    %v241 = vadd.f32 %v239, %v240
    %v242 = vrot.slane %v241, 2
    %v243 = vadd.f32 %v241, %v242
    %v244 = vrot.slane %v243, 1
    %v245 = vadd.f32 %v243, %v244
    %v246 = vadd.f32 %v208, %v245
    %247 = vst [vmem:[#allocation4] sm:$0x1] %v246
    %v248 = vld [vmem:[#allocation2] sm:$0xff]
    %v249 = vld [vmem:[#allocation2 + $0x8] sm:$0xff]
    %v250 = vld [vmem:[#allocation2 + $0x10] sm:$0xff]
    %v251 = vld [vmem:[#allocation2 + $0x18] sm:$0xff]
    %v252 = vld [vmem:[#allocation2 + $0x20] sm:$0xff]
    %v253 = vld [vmem:[#allocation2 + $0x28] sm:$0xff]
    %v254 = vld [vmem:[#allocation2 + $0x30] sm:$0xff]
    %v255 = vld [vmem:[#allocation2 + $0x38] sm:$0xff]
    %v256 = vld [vmem:[#allocation2 + $0x40] sm:$0xff]
    %v257 = vld [vmem:[#allocation2 + $0x48] sm:$0xff]
    %v258 = vld [vmem:[#allocation2 + $0x50] sm:$0xff]
    %v259 = vld [vmem:[#allocation2 + $0x58] sm:$0xff]
    %v260 = vld [vmem:[#allocation2 + $0x60] sm:$0xff]
    %v261 = vld [vmem:[#allocation2 + $0x68] sm:$0xff]
    %v262 = vld [vmem:[#allocation2 + $0x70] sm:$0xff]
    %v263 = vld [vmem:[#allocation2 + $0x78] sm:$0xff]
    %v264 = vpack.c.bf16 %v80, %v79
    %v265 = vpack.c.bf16 %v82, %v81
    %v266 = vpack.c.bf16 %v84, %v83
    %v267 = vpack.c.bf16 %v86, %v85
    %v268 = vpack.c.bf16 %v88, %v87
    %v269 = vpack.c.bf16 %v90, %v89
    %v270 = vpack.c.bf16 %v92, %v91
    %v271 = vpack.c.bf16 %v94, %v93
    %v272 = vpack.c.bf16 %v96, %v95
    %v273 = vpack.c.bf16 %v98, %v97
    %v274 = vpack.c.bf16 %v100, %v99
    %v275 = vpack.c.bf16 %v102, %v101
    %v276 = vpack.c.bf16 %v104, %v103
    %v277 = vpack.c.bf16 %v106, %v105
    %v278 = vpack.c.bf16 %v108, %v107
    %v279 = vpack.c.bf16 %v110, %v109
    %280 = vmatprep.subr.bf16.mxu0 0
    %281 = vmatpush1.bf16.msra.mxu0 %v272
    %282 = vmatprep.subr.bf16.mxu0 0
    %283 = vmatpush1.bf16.msra.mxu0 %v273
    %284 = vmatprep.subr.bf16.mxu0 0
    %285 = vmatpush1.bf16.msra.mxu0 %v274
    %286 = vmatprep.subr.bf16.mxu0 0
    %287 = vmatpush1.bf16.msra.mxu0 %v275
    %288 = vmatprep.subr.bf16.mxu0 0
    %289 = vmatpush1.bf16.msra.mxu0 %v276
    %290 = vmatprep.subr.bf16.mxu0 0
    %291 = vmatpush1.bf16.msra.mxu0 %v277
    %292 = vmatprep.subr.bf16.mxu0 0
    %293 = vmatpush1.bf16.msra.mxu0 %v278
    %294 = vmatprep.subr.bf16.mxu0 0
    %295 = vmatpush1.bf16.msra.mxu0 %v279
    %296 = vmatprep.subr.bf16.mxu0 0
    %297 = vmatpush1.bf16.msra.mxu0 0
    %298 = vmatprep.subr.bf16.mxu0 0
    %299 = vmatpush1.bf16.msra.mxu0 0
    %300 = vmatprep.subr.bf16.mxu0 0
    %301 = vmatpush1.bf16.msra.mxu0 0
    %302 = vmatprep.subr.bf16.mxu0 0
    %303 = vmatpush1.bf16.msra.mxu0 0
    %304 = vmatprep.subr.bf16.mxu0 0
    %305 = vmatpush1.bf16.msra.mxu0 0
    %306 = vmatprep.subr.bf16.mxu0 0
    %307 = vmatpush1.bf16.msra.mxu0 0
    %308 = vmatprep.subr.bf16.mxu0 0
    %309 = vmatpush1.bf16.msra.mxu0 0
    %310 = vmatprep.subr.bf16.mxu0 0
    %311 = vmatpush1.bf16.msra.mxu0 0
    %312 = vmatprep.mubr.bf16.mxu0 0
    %313 = vmatmul.mubr.bf16.gmra.mrb[0].mxu0 %v264
    %v314 = vpop.f32.mrb[0].mxu0
    %v315 = vadd.f32 0.0, %v314
    %v316 = vpop.f32.mrb[0].mxu0
    %v317 = vpop.f32.mrb[0].mxu0
    %v318 = vadd.f32 0.0, %v317
    %v319 = vpop.f32.mrb[0].mxu0
    %320 = vmatprep.mubr.bf16.mxu0 0
    %321 = vmatmul.mubr.bf16.gmra.mrb[0].mxu0 %v265
    %v322 = vpop.f32.mrb[0].mxu0
    %v323 = vadd.f32 0.0, %v322
    %v324 = vpop.f32.mrb[0].mxu0
    %v325 = vpop.f32.mrb[0].mxu0
    %v326 = vadd.f32 0.0, %v325
    %v327 = vpop.f32.mrb[0].mxu0
    %328 = vmatprep.mubr.bf16.mxu0 0
    %329 = vmatmul.mubr.bf16.gmra.mrb[0].mxu0 %v266
    %v330 = vpop.f32.mrb[0].mxu0
    %v331 = vadd.f32 0.0, %v330
    %v332 = vpop.f32.mrb[0].mxu0
    %v333 = vpop.f32.mrb[0].mxu0
    %v334 = vadd.f32 0.0, %v333
    %v335 = vpop.f32.mrb[0].mxu0
    %336 = vmatprep.mubr.bf16.mxu0 0
    %337 = vmatmul.mubr.bf16.gmra.mrb[0].mxu0 %v267
    %v338 = vpop.f32.mrb[0].mxu0
    %v339 = vadd.f32 0.0, %v338
    %v340 = vpop.f32.mrb[0].mxu0
    %v341 = vpop.f32.mrb[0].mxu0
    %v342 = vadd.f32 0.0, %v341
    %v343 = vpop.f32.mrb[0].mxu0
    %344 = vmatprep.mubr.bf16.mxu0 0
    %345 = vmatmul.mubr.bf16.gmra.mrb[0].mxu0 %v268
    %v346 = vpop.f32.mrb[0].mxu0
    %v347 = vadd.f32 0.0, %v346
    %v348 = vpop.f32.mrb[0].mxu0
    %v349 = vpop.f32.mrb[0].mxu0
    %v350 = vadd.f32 0.0, %v349
    %v351 = vpop.f32.mrb[0].mxu0
    %352 = vmatprep.mubr.bf16.mxu0 0
    %353 = vmatmul.mubr.bf16.gmra.mrb[0].mxu0 %v269
    %v354 = vpop.f32.mrb[0].mxu0
    %v355 = vadd.f32 0.0, %v354
    %v356 = vpop.f32.mrb[0].mxu0
    %v357 = vpop.f32.mrb[0].mxu0
    %v358 = vadd.f32 0.0, %v357
    %v359 = vpop.f32.mrb[0].mxu0
    %360 = vmatprep.mubr.bf16.mxu0 0
    %361 = vmatmul.mubr.bf16.gmra.mrb[0].mxu0 %v270
    %v362 = vpop.f32.mrb[0].mxu0
    %v363 = vadd.f32 0.0, %v362
    %v364 = vpop.f32.mrb[0].mxu0
    %v365 = vpop.f32.mrb[0].mxu0
    %v366 = vadd.f32 0.0, %v365
    %v367 = vpop.f32.mrb[0].mxu0
    %368 = vmatprep.mubr.bf16.mxu0 0
    %369 = vmatmul.mubr.bf16.gmra.mrb[0].mxu0 %v271
    %v370 = vpop.f32.mrb[0].mxu0
    %v371 = vadd.f32 0.0, %v370
    %v372 = vpop.f32.mrb[0].mxu0
    %v373 = vpop.f32.mrb[0].mxu0
    %v374 = vadd.f32 0.0, %v373
    %v375 = vpop.f32.mrb[0].mxu0
    %376 = vdwg.mxu0
    %v377 = vadd.f32 %v248, %v315
    %v378 = vadd.f32 %v249, %v318
    %v379 = vadd.f32 %v250, %v323
    %v380 = vadd.f32 %v251, %v326
    %v381 = vadd.f32 %v252, %v331
    %v382 = vadd.f32 %v253, %v334
    %v383 = vadd.f32 %v254, %v339
    %v384 = vadd.f32 %v255, %v342
    %v385 = vadd.f32 %v256, %v347
    %v386 = vadd.f32 %v257, %v350
    %v387 = vadd.f32 %v258, %v355
    %v388 = vadd.f32 %v259, %v358
    %v389 = vadd.f32 %v260, %v363
    %v390 = vadd.f32 %v261, %v366
    %v391 = vadd.f32 %v262, %v371
    %v392 = vadd.f32 %v263, %v374
    %393 = vst [vmem:[#allocation2] sm:$0xff] %v377
    %394 = vst [vmem:[#allocation2 + $0x8] sm:$0xff] %v378
    %395 = vst [vmem:[#allocation2 + $0x10] sm:$0xff] %v379
    %396 = vst [vmem:[#allocation2 + $0x18] sm:$0xff] %v380
    %397 = vst [vmem:[#allocation2 + $0x20] sm:$0xff] %v381
    %398 = vst [vmem:[#allocation2 + $0x28] sm:$0xff] %v382
    %399 = vst [vmem:[#allocation2 + $0x30] sm:$0xff] %v383
    %400 = vst [vmem:[#allocation2 + $0x38] sm:$0xff] %v384
    %401 = vst [vmem:[#allocation2 + $0x40] sm:$0xff] %v385
    %402 = vst [vmem:[#allocation2 + $0x48] sm:$0xff] %v386
    %403 = vst [vmem:[#allocation2 + $0x50] sm:$0xff] %v387
    %404 = vst [vmem:[#allocation2 + $0x58] sm:$0xff] %v388
    %405 = vst [vmem:[#allocation2 + $0x60] sm:$0xff] %v389
    %406 = vst [vmem:[#allocation2 + $0x68] sm:$0xff] %v390
    %407 = vst [vmem:[#allocation2 + $0x70] sm:$0xff] %v391
    %408 = vst [vmem:[#allocation2 + $0x78] sm:$0xff] %v392
    // Predicated region
    $region22: #{tpu_custom_call.1} parent=1 // pred_check
      %p409 = pneg %p41
    $region23: #{tpu_custom_call.1} parent=1 // pred_check_branch
      %411 = sbr.rel (%p409) target = $region25
    $region24: #{tpu_custom_call.1} parent=1 // pred_region
      %v412 = vld [vmem:[#allocation3] sm:$0xff]
      %v413 = vld [vmem:[#allocation3 + $0x8] sm:$0xff]
      %v414 = vld [vmem:[#allocation3 + $0x10] sm:$0xff]
      %v415 = vld [vmem:[#allocation3 + $0x18] sm:$0xff]
      %v416 = vld [vmem:[#allocation3 + $0x20] sm:$0xff]
      %v417 = vld [vmem:[#allocation3 + $0x28] sm:$0xff]
      %v418 = vld [vmem:[#allocation3 + $0x30] sm:$0xff]
      %v419 = vld [vmem:[#allocation3 + $0x38] sm:$0xff]
      %v420 = vld [vmem:[#allocation3 + $0x40] sm:$0xff]
      %v421 = vld [vmem:[#allocation3 + $0x48] sm:$0xff]
      %v422 = vld [vmem:[#allocation3 + $0x50] sm:$0xff]
      %v423 = vld [vmem:[#allocation3 + $0x58] sm:$0xff]
      %v424 = vld [vmem:[#allocation3 + $0x60] sm:$0xff]
      %v425 = vld [vmem:[#allocation3 + $0x68] sm:$0xff]
      %v426 = vld [vmem:[#allocation3 + $0x70] sm:$0xff]
      %v427 = vld [vmem:[#allocation3 + $0x78] sm:$0xff]
      %v428 = vmax.f32 %v412, 1e-24
      %v429 = vmax.f32 %v413, 1e-24
      %v430 = vmax.f32 %v414, 1e-24
      %v431 = vmax.f32 %v415, 1e-24
      %v432 = vmax.f32 %v416, 1e-24
      %v433 = vmax.f32 %v417, 1e-24
      %v434 = vmax.f32 %v418, 1e-24
      %v435 = vmax.f32 %v419, 1e-24
      %v436 = vmax.f32 %v420, 1e-24
      %v437 = vmax.f32 %v421, 1e-24
      %v438 = vmax.f32 %v422, 1e-24
      %v439 = vmax.f32 %v423, 1e-24
      %v440 = vmax.f32 %v424, 1e-24
      %v441 = vmax.f32 %v425, 1e-24
      %v442 = vmax.f32 %v426, 1e-24
      %v443 = vmax.f32 %v427, 1e-24
      %v444 = vrsqrt.pop %v428
      %v445 = vrsqrt.pop %v429
      %v446 = vrsqrt.pop %v430
      %v447 = vrsqrt.pop %v431
      %v448 = vrsqrt.pop %v432
      %v449 = vrsqrt.pop %v433
      %v450 = vrsqrt.pop %v434
      %v451 = vrsqrt.pop %v435
      %v452 = vrsqrt.pop %v436
      %v453 = vrsqrt.pop %v437
      %v454 = vrsqrt.pop %v438
      %v455 = vrsqrt.pop %v439
      %v456 = vrsqrt.pop %v440
      %v457 = vrsqrt.pop %v441
      %v458 = vrsqrt.pop %v442
      %v459 = vrsqrt.pop %v443
      %v460 = vld [vmem:[#allocation4] sm:$0x1]
      %v461 = vmax.f32 %v460, 1e-24
      %v462 = vrsqrt.pop %v461
      %v463 = vld [vmem:[#allocation2] sm:$0xff]
      %v464 = vld [vmem:[#allocation2 + $0x8] sm:$0xff]
      %v465 = vld [vmem:[#allocation2 + $0x10] sm:$0xff]
      %v466 = vld [vmem:[#allocation2 + $0x18] sm:$0xff]
      %v467 = vld [vmem:[#allocation2 + $0x20] sm:$0xff]
      %v468 = vld [vmem:[#allocation2 + $0x28] sm:$0xff]
      %v469 = vld [vmem:[#allocation2 + $0x30] sm:$0xff]
      %v470 = vld [vmem:[#allocation2 + $0x38] sm:$0xff]
      %v471 = vld [vmem:[#allocation2 + $0x40] sm:$0xff]
      %v472 = vld [vmem:[#allocation2 + $0x48] sm:$0xff]
      %v473 = vld [vmem:[#allocation2 + $0x50] sm:$0xff]
      %v474 = vld [vmem:[#allocation2 + $0x58] sm:$0xff]
      %v475 = vld [vmem:[#allocation2 + $0x60] sm:$0xff]
      %v476 = vld [vmem:[#allocation2 + $0x68] sm:$0xff]
      %v477 = vld [vmem:[#allocation2 + $0x70] sm:$0xff]
      %v478 = vld [vmem:[#allocation2 + $0x78] sm:$0xff]
      %480 = vset.pattern.permute.xlu0 0
      %481 = vperm.xlu0 %480, %v444
      %v482 = vpop.permute.xlu0 %481
      %485 = vset.pattern.permute.xlu0 0
      %486 = vperm.xlu0 %485, %v445
      %v487 = vpop.permute.xlu0 %486
      %490 = vset.pattern.permute.xlu0 0
      %491 = vperm.xlu0 %490, %v446
      %v492 = vpop.permute.xlu0 %491
      %495 = vset.pattern.permute.xlu0 0
      %496 = vperm.xlu0 %495, %v447
      %v497 = vpop.permute.xlu0 %496
      %500 = vset.pattern.permute.xlu0 0
      %501 = vperm.xlu0 %500, %v448
      %v502 = vpop.permute.xlu0 %501
      %505 = vset.pattern.permute.xlu0 0
      %506 = vperm.xlu0 %505, %v449
      %v507 = vpop.permute.xlu0 %506
      %510 = vset.pattern.permute.xlu0 0
      %511 = vperm.xlu0 %510, %v450
      %v512 = vpop.permute.xlu0 %511
      %515 = vset.pattern.permute.xlu0 0
      %516 = vperm.xlu0 %515, %v451
      %v517 = vpop.permute.xlu0 %516
      %520 = vset.pattern.permute.xlu0 0
      %521 = vperm.xlu0 %520, %v452
      %v522 = vpop.permute.xlu0 %521
      %525 = vset.pattern.permute.xlu0 0
      %526 = vperm.xlu0 %525, %v453
      %v527 = vpop.permute.xlu0 %526
      %530 = vset.pattern.permute.xlu0 0
      %531 = vperm.xlu0 %530, %v454
      %v532 = vpop.permute.xlu0 %531
      %535 = vset.pattern.permute.xlu0 0
      %536 = vperm.xlu0 %535, %v455
      %v537 = vpop.permute.xlu0 %536
      %540 = vset.pattern.permute.xlu0 0
      %541 = vperm.xlu0 %540, %v456
      %v542 = vpop.permute.xlu0 %541
      %545 = vset.pattern.permute.xlu0 0
      %546 = vperm.xlu0 %545, %v457
      %v547 = vpop.permute.xlu0 %546
      %550 = vset.pattern.permute.xlu0 0
      %551 = vperm.xlu0 %550, %v458
      %v552 = vpop.permute.xlu0 %551
      %555 = vset.pattern.permute.xlu0 0
      %556 = vperm.xlu0 %555, %v459
      %v557 = vpop.permute.xlu0 %556
      %v559 = vmul.f32 %v463, %v482
      %v560 = vmul.f32 %v464, %v487
      %v561 = vmul.f32 %v465, %v492
      %v562 = vmul.f32 %v466, %v497
      %v563 = vmul.f32 %v467, %v502
      %v564 = vmul.f32 %v468, %v507
      %v565 = vmul.f32 %v469, %v512
      %v566 = vmul.f32 %v470, %v517
      %v567 = vmul.f32 %v471, %v522
      %v568 = vmul.f32 %v472, %v527
      %v569 = vmul.f32 %v473, %v532
      %v570 = vmul.f32 %v474, %v537
      %v571 = vmul.f32 %v475, %v542
      %v572 = vmul.f32 %v476, %v547
      %v573 = vmul.f32 %v477, %v552
      %v574 = vmul.f32 %v478, %v557
      %v576 = vlaneseq
      %v577 = vshrl.u32 %v576, 7
      %v578 = vsub.s32 0, %v577
      %v579 = vrot.slane %v462, %v578
      %v581 = vmul.f32 %v559, %v579
      %v582 = vmul.f32 %v560, %v579
      %v583 = vmul.f32 %v561, %v579
      %v584 = vmul.f32 %v562, %v579
      %v585 = vmul.f32 %v563, %v579
      %v586 = vmul.f32 %v564, %v579
      %v587 = vmul.f32 %v565, %v579
      %v588 = vmul.f32 %v566, %v579
      %v589 = vmul.f32 %v567, %v579
      %v590 = vmul.f32 %v568, %v579
      %v591 = vmul.f32 %v569, %v579
      %v592 = vmul.f32 %v570, %v579
      %v593 = vmul.f32 %v571, %v579
      %v594 = vmul.f32 %v572, %v579
      %v595 = vmul.f32 %v573, %v579
      %v596 = vmul.f32 %v574, %v579
      %597 = vst [vmem:[#allocation10] sm:$0xff] %v581
      %598 = vst [vmem:[#allocation10 + $0x8] sm:$0xff] %v582
      %599 = vst [vmem:[#allocation10 + $0x10] sm:$0xff] %v583
      %600 = vst [vmem:[#allocation10 + $0x18] sm:$0xff] %v584
      %601 = vst [vmem:[#allocation10 + $0x20] sm:$0xff] %v585
      %602 = vst [vmem:[#allocation10 + $0x28] sm:$0xff] %v586
      %603 = vst [vmem:[#allocation10 + $0x30] sm:$0xff] %v587
      %604 = vst [vmem:[#allocation10 + $0x38] sm:$0xff] %v588
      %605 = vst [vmem:[#allocation10 + $0x40] sm:$0xff] %v589
      %606 = vst [vmem:[#allocation10 + $0x48] sm:$0xff] %v590
      %607 = vst [vmem:[#allocation10 + $0x50] sm:$0xff] %v591
      %608 = vst [vmem:[#allocation10 + $0x58] sm:$0xff] %v592
      %609 = vst [vmem:[#allocation10 + $0x60] sm:$0xff] %v593
      %610 = vst [vmem:[#allocation10 + $0x68] sm:$0xff] %v594
      %611 = vst [vmem:[#allocation10 + $0x70] sm:$0xff] %v595
      %612 = vst [vmem:[#allocation10 + $0x78] sm:$0xff] %v596
    $region25: #{tpu_custom_call.1} parent=1 // pred_fallthru
      _
    // Predicated region
    $region26: #{tpu_custom_call.1} parent=1 // pred_check
      _
    $region27: #{tpu_custom_call.1} parent=1 // pred_check_branch
      %614 = sbr.rel (0) target = $region29
    $region28: #{tpu_custom_call.1} parent=1 // pred_region
      %s616 = ssub.s32 2048, 2048
      %617 = vsyncadd [#allocation7], %s616
      %s618 = sshll.u32 [#allocation10], 4
      %s619 = int_to_ptr.vmem [resolvable:$true] %s618
      %624 = dma.vmem_to_hbm [thread:$0]  %s619, 2048, %s2, [#allocation7], 128, 128, 8
    $region29: #{tpu_custom_call.1} parent=1 // pred_fallthru
      _
    // Predicated region
    $region30: #{tpu_custom_call.1} parent=1 // pred_check
      _
    $region31: #{tpu_custom_call.1} parent=1 // pred_check_branch
      %626 = sbr.rel (0) target = $region33
    $region32: #{tpu_custom_call.1} parent=1 // pred_region
      %627 = dma.done [#allocation7], 2048
    $region33: #{tpu_custom_call.1} parent=1 // pred_fallthru
      _
    %628 = vsyncpa [#allocation6], 1
    %629 = vsyncpa [#allocation9], 1
    %630 = vsyncpa [#allocation7], 1

</llo_original>
